<compile_context>
chip_gen: v5e
topology: v5e:2x2
jax: 0.10.0
libtpu: 0.0.40
codegen_flags: <defaults>
</compile_context>

<pallas_src>
import functools

import jax
import jax.numpy as jnp
from jax import lax
from jax.experimental import pallas as pl
from jax.experimental.pallas import tpu as pltpu

_LANE = 128
_SUBLANE = 8
_EPS = 1e-5


def _round_up(v, m):
    return ((v + m - 1) // m) * m


def _vmem_capacity_bytes():
    try:
        return int(pltpu.get_tpu_info().vmem_capacity_bytes)
    except Exception:
        return 64 * 1024 * 1024  # conservative default (v7x per-TC VMEM)


def _vmem_bytes(d_in, d_h_p, d_out, x_item, w_item, out_item):
    """(resident weight bytes, per-row VMEM bytes) for sizing & vmem_limit."""
    d_c = d_h_p + d_out
    # default pipelining => 2 buffers for every block (weights included)
    weights = 2 * (w_item * (d_in * d_c + d_h_p * d_out) + 4 * (d_c + 3 * d_out))
    per_row = (2 * d_in * x_item          # x tile, double buffered
               + 2 * d_out * out_item     # out tile, double buffered
               + 4 * (d_c + 4 * d_out)    # f32 hs + dense/skip/y/centered live values
               + w_item * d_h_p           # h cast to the MXU feed dtype
               + 16)                      # mean/var scalars per row
    return weights, per_row


def _choose_tile_rows(n, vmem_budget, weights, per_row, max_tile=4096):
    """Largest row tile that fits the VMEM budget; MXU/lane friendly."""
    avail = max(vmem_budget - weights, 1 << 20)
    t = int(min(max_tile, max(avail // per_row, _SUBLANE)))
    if t >= n:
        # single (or near-single) block: never exceed the array's row extent
        t = n if n < _SUBLANE else (n // _SUBLANE) * _SUBLANE
    elif t >= _LANE:
        t = (t // _LANE) * _LANE          # full-height MXU passes
    else:
        t = max(_SUBLANE, (t // _SUBLANE) * _SUBLANE)
    return t


def _residual_block_kernel(x_ref, wc_ref, bc_ref, w2_ref, b2_ref,
                           gamma_ref, beta_ref, o_ref, *,
                           d_h_p, use_layer_norm):
    x = x_ref[...]
    if x.dtype != wc_ref.dtype:
        x = x.astype(wc_ref.dtype)        # in-kernel cast: no extra HBM pass over x

    # One fused MXU pass over x: [hidden | skip] = x @ [W1 | Ws] + [b1 | bs]
    hs = jnp.dot(x, wc_ref[...], preferred_element_type=jnp.float32) + bc_ref[...]
    h = jnp.maximum(hs[:, :d_h_p], 0.0).astype(w2_ref.dtype)   # 128-aligned split
    skip = hs[:, d_h_p:]

    dense = jnp.dot(h, w2_ref[...], preferred_element_type=jnp.float32) + b2_ref[...]
    y = dense + skip

    if use_layer_norm:
        # LayerNorm over the real (unpadded) feature dim; eps matches torch (1e-5).
        mean = jnp.mean(y, axis=-1, keepdims=True)
        c = y - mean
        var = jnp.mean(c * c, axis=-1, keepdims=True)
        y = c * lax.rsqrt(var + _EPS) * gamma_ref[...] + beta_ref[...]

    o_ref[...] = y.astype(o_ref.dtype)


def prepare_params(params, compute_dtype=None):
    """One-time weight prep (hoisted out of the per-call path):
    pad the hidden dim to a lane multiple, fuse [W1 | Ws] / [b1 | bs], cast the
    MXU-fed weights to compute_dtype (biases / gamma / beta stay f32)."""
    w1, w2, ws = params["w1"], params["w2"], params["ws"]
    d_in, d_hidden = w1.shape
    d_out = w2.shape[1]
    d_h_p = _round_up(d_hidden, _LANE)
    pad_h = d_h_p - d_hidden

    w_dtype = jnp.dtype(compute_dtype) if compute_dtype is not None else w1.dtype

    w1p = jnp.pad(w1, ((0, 0), (0, pad_h)))
    b1p = jnp.pad(params["b1"], ((0, 0), (0, pad_h)))
    w2p = jnp.pad(w2, ((0, pad_h), (0, 0)))

    return {
        "wc": jnp.concatenate([w1p, ws], axis=1).astype(w_dtype),      # (d_in, d_h_p + d_out)
        "bc": jnp.concatenate([b1p, params["bs"]], axis=1).astype(jnp.float32),
        "w2": w2p.astype(w_dtype),                                     # (d_h_p, d_out)
        "b2": params["b2"].astype(jnp.float32),
        "gamma": params["gamma"].astype(jnp.float32),
        "beta": params["beta"].astype(jnp.float32),
        "d_in": int(d_in),
        "d_hidden": int(d_hidden),
        "d_h_p": int(d_h_p),
        "d_out": int(d_out),
    }


def residual_block(x, prep, *, tile_rows=None, use_layer_norm=True):
    """x: (N, input_dim); prep: dict from prepare_params. Returns (N, output_dim)."""
    n, d_in = x.shape
    if d_in != prep["d_in"]:
        raise ValueError(f"x feature dim {d_in} != prepared input_dim {prep['d_in']}")
    d_hidden, d_h_p, d_out = prep["d_hidden"], prep["d_h_p"], prep["d_out"]
    wc, bc, w2, b2 = prep["wc"], prep["bc"], prep["w2"], prep["b2"]
    gamma, beta = prep["gamma"], prep["beta"]

    x_item = jnp.dtype(x.dtype).itemsize
    w_item = jnp.dtype(wc.dtype).itemsize
    out_item = x_item

    vmem_cap = _vmem_capacity_bytes()
    weights_b, per_row_b = _vmem_bytes(d_in, d_h_p, d_out, x_item, w_item, out_item)
    if tile_rows is None:
        tile_rows = _choose_tile_rows(n, vmem_cap // 2, weights_b, per_row_b)
    grid = (pl.cdiv(n, tile_rows),)       # ragged last block; OOB writes dropped

    kernel = functools.partial(_residual_block_kernel,
                               d_h_p=d_h_p, use_layer_norm=use_layer_norm)

    def row_map(i):
        return (i, 0)

    def const_map(i):
        return (0, 0)                     # grid-invariant: DMA'd from HBM once

    in_specs = [
        pl.BlockSpec((tile_rows, d_in), row_map),            # x tile (full-extent feature dim)
        pl.BlockSpec((d_in, d_h_p + d_out), const_map),      # [W1 | Ws]
        pl.BlockSpec((1, d_h_p + d_out), const_map),         # [b1 | bs]
        pl.BlockSpec((d_h_p, d_out), const_map),             # W2
        pl.BlockSpec((1, d_out), const_map),                  # b2
        pl.BlockSpec((1, d_out), const_map),                  # gamma
        pl.BlockSpec((1, d_out), const_map),                  # beta
    ]
    out_specs = pl.BlockSpec((tile_rows, d_out), row_map)

    # Advisory cost estimate with real dtype itemsizes (un-padded work).
    flops = 2 * n * (d_in * (d_hidden + d_out) + d_hidden * d_out)
    bytes_accessed = (n * d_in * x_item + n * d_out * out_item
                      + w_item * (d_in * (d_h_p + d_out) + d_h_p * d_out)
                      + 4 * (d_h_p + 4 * d_out))
    cost = pl.CostEstimate(flops=flops,
                           transcendentals=n if use_layer_norm else 0,
                           bytes_accessed=bytes_accessed)

    needed = weights_b + tile_rows * per_row_b
    vmem_limit = int(min(max(2 * needed, 32 * 1024 * 1024), (3 * vmem_cap) // 4))

    return pl.pallas_call(
        kernel,
        out_shape=jax.ShapeDtypeStruct((n, d_out), x.dtype),
        grid_spec=pltpu.PrefetchScalarGridSpec(
            num_scalar_prefetch=0,
            grid=grid,
            in_specs=in_specs,
            out_specs=out_specs,
        ),
        compiler_params=pltpu.CompilerParams(
            dimension_semantics=("parallel",),
            vmem_limit_bytes=vmem_limit,
        ),
        cost_estimate=cost,
    )(x, wc, bc, w2, b2, gamma, beta)


def init_params(key, input_dim, output_dim, hidden_size):
    """Deterministic synthetic parameter init (shapes match nn.Linear / LayerNorm).

    PyTorch Linear stores weight as (out, in); we store the transpose (in, out)
    so the kernel computes x @ W directly — semantics are identical."""
    ks = jax.random.split(key, 6)
    s1 = 1.0 / jnp.sqrt(input_dim)
    s2 = 1.0 / jnp.sqrt(hidden_size)
    return {
        "w1": jax.random.uniform(ks[0], (input_dim, hidden_size), jnp.float32, -s1, s1),
        "b1": jax.random.uniform(ks[1], (1, hidden_size), jnp.float32, -s1, s1),
        "w2": jax.random.uniform(ks[2], (hidden_size, output_dim), jnp.float32, -s2, s2),
        "b2": jax.random.uniform(ks[3], (1, output_dim), jnp.float32, -s2, s2),
        "ws": jax.random.uniform(ks[4], (input_dim, output_dim), jnp.float32, -s1, s1),
        "bs": jax.random.uniform(ks[5], (1, output_dim), jnp.float32, -s1, s1),
        "gamma": jnp.ones((1, output_dim), jnp.float32),
        "beta": jnp.zeros((1, output_dim), jnp.float32),
    }


def reference(x, p):
    h = jnp.maximum(x @ p["w1"] + p["b1"], 0.0)
    y = h @ p["w2"] + p["b2"] + (x @ p["ws"] + p["bs"])
    mean = y.mean(-1, keepdims=True)
    var = ((y - mean) ** 2).mean(-1, keepdims=True)
    y = (y - mean) / jnp.sqrt(var + _EPS)
    return y * p["gamma"] + p["beta"]


if __name__ == "__main__":
    # Small shapes: batch=2, seq=8 -> N=16 rows; input_dim=32, hidden=64, output_dim=32.
    batch, seq = 2, 8
    input_dim, hidden_size, output_dim = 32, 64, 32

    key = jax.random.PRNGKey(0)
    kx, kp = jax.random.split(key)
    x = jax.random.normal(kx, (batch, seq, input_dim), jnp.float32)
    params = init_params(kp, input_dim, output_dim, hidden_size)
    x2d = x.reshape(batch * seq, input_dim)

    ref = reference(x2d, params)

    # f32 MXU feed (matches PyTorch numerics).
    prep_f32 = prepare_params(params)
    out = jax.block_until_ready(residual_block(x2d, prep_f32))
    assert out.shape == (batch * seq, output_dim)
    assert jnp.allclose(out, ref, atol=1e-4, rtol=1e-4), "f32 mismatch vs reference"

    # Ragged row tail (N not a multiple of the row tile): OOB rows are dropped.
    n_ragged = 13
    out_r = jax.block_until_ready(residual_block(x2d[:n_ragged], prep_f32))
    assert out_r.shape == (n_ragged, output_dim)
    assert jnp.allclose(out_r, ref[:n_ragged], atol=1e-4, rtol=1e-4), "ragged-tail mismatch"

    # bf16-fed MXU path (f32 accumulation): halves weight HBM traffic.
    prep_bf16 = prepare_params(params, compute_dtype=jnp.bfloat16)
    out_bf16 = jax.block_until_ready(residual_block(x2d, prep_bf16))
    assert out_bf16.shape == (batch * seq, output_dim)
    assert bool(jnp.all(jnp.isfinite(out_bf16)))
    assert jnp.allclose(out_bf16, ref, atol=1e-1, rtol=1e-1), "bf16 mismatch vs reference"

    # restore original leading dims (like PyTorch broadcasting over leading axes)
    _ = out.reshape(batch, seq, output_dim)

    print("KERNEL_OK")
</pallas_src>

<mosaic_0001>
module attributes {stable_mosaic.version = 11 : i64} {
  func.func @_residual_block_kernel(%arg0: i32, %arg1: memref<16x32xf32, #tpu.memory_space<vmem>>, %arg2: memref<32x160xf32, #tpu.memory_space<vmem>>, %arg3: memref<1x160xf32, #tpu.memory_space<vmem>>, %arg4: memref<128x32xf32, #tpu.memory_space<vmem>>, %arg5: memref<1x32xf32, #tpu.memory_space<vmem>>, %arg6: memref<1x32xf32, #tpu.memory_space<vmem>>, %arg7: memref<1x32xf32, #tpu.memory_space<vmem>>, %arg8: memref<16x32xf32, #tpu.memory_space<vmem>>) attributes {dimension_semantics = [#tpu.dimension_semantics<parallel>], iteration_bounds = array<i64: 1>, scalar_prefetch = 0 : i64, scratch_operands = 0 : i64, tpu.core_type = #tpu.core_type<tc>, window_params = [{transform_indices = @transform_0, window_bounds = array<i64: 16, 32>}, {pipeline_mode = #tpu.pipeline_mode<synchronous>, transform_indices = @transform_1, window_bounds = array<i64: 32, 160>}, {pipeline_mode = #tpu.pipeline_mode<synchronous>, transform_indices = @transform_2, window_bounds = array<i64: 1, 160>}, {pipeline_mode = #tpu.pipeline_mode<synchronous>, transform_indices = @transform_3, window_bounds = array<i64: 128, 32>}, {pipeline_mode = #tpu.pipeline_mode<synchronous>, transform_indices = @transform_4, window_bounds = array<i64: 1, 32>}, {pipeline_mode = #tpu.pipeline_mode<synchronous>, transform_indices = @transform_5, window_bounds = array<i64: 1, 32>}, {pipeline_mode = #tpu.pipeline_mode<synchronous>, transform_indices = @transform_6, window_bounds = array<i64: 1, 32>}, {transform_indices = @transform_7, window_bounds = array<i64: 16, 32>}]} {
    %c0 = arith.constant 0 : index
    %c0_0 = arith.constant 0 : index
    %0 = vector.load %arg1[%c0, %c0_0] : memref<16x32xf32, #tpu.memory_space<vmem>>, vector<16x32xf32>
    %c0_1 = arith.constant 0 : index
    %c0_2 = arith.constant 0 : index
    %1 = vector.load %arg2[%c0_1, %c0_2] : memref<32x160xf32, #tpu.memory_space<vmem>>, vector<32x160xf32>
    %cst = arith.constant dense<0.000000e+00> : vector<16x160xf32>
    %2 = tpu.matmul %0, %1, %cst {dimension_numbers = #tpu.dot_dimension_numbers<[1], [0], [0], [1], [0, 0, 1, 1], [], []>} : vector<16x32xf32>, vector<32x160xf32>, vector<16x160xf32> -> vector<16x160xf32>
    %c0_3 = arith.constant 0 : index
    %c0_4 = arith.constant 0 : index
    %3 = vector.load %arg3[%c0_3, %c0_4] : memref<1x160xf32, #tpu.memory_space<vmem>>, vector<1x160xf32>
    %4 = vector.broadcast %3 : vector<1x160xf32> to vector<16x160xf32>
    %5 = arith.addf %2, %4 : vector<16x160xf32>
    %6 = vector.extract_strided_slice %5 {offsets = [0, 0], sizes = [16, 128], strides = [1, 1]} : vector<16x160xf32> to vector<16x128xf32>
    %cst_5 = arith.constant 0.000000e+00 : f32
    %7 = vector.broadcast %cst_5 : f32 to vector<16x128xf32>
    %8 = arith.maximumf %6, %7 : vector<16x128xf32>
    %9 = vector.extract_strided_slice %5 {offsets = [0, 128], sizes = [16, 32], strides = [1, 1]} : vector<16x160xf32> to vector<16x32xf32>
    %c0_6 = arith.constant 0 : index
    %c0_7 = arith.constant 0 : index
    %10 = vector.load %arg4[%c0_6, %c0_7] : memref<128x32xf32, #tpu.memory_space<vmem>>, vector<128x32xf32>
    %cst_8 = arith.constant dense<0.000000e+00> : vector<16x32xf32>
    %11 = tpu.matmul %8, %10, %cst_8 {dimension_numbers = #tpu.dot_dimension_numbers<[1], [0], [0], [1], [0, 0, 1, 1], [], []>} : vector<16x128xf32>, vector<128x32xf32>, vector<16x32xf32> -> vector<16x32xf32>
    %c0_9 = arith.constant 0 : index
    %c0_10 = arith.constant 0 : index
    %12 = vector.load %arg5[%c0_9, %c0_10] : memref<1x32xf32, #tpu.memory_space<vmem>>, vector<1x32xf32>
    %13 = vector.broadcast %12 : vector<1x32xf32> to vector<16x32xf32>
    %14 = arith.addf %11, %13 : vector<16x32xf32>
    %15 = arith.addf %14, %9 : vector<16x32xf32>
    %cst_11 = arith.constant dense<0.000000e+00> : vector<16xf32>
    %16 = vector.multi_reduction <add>, %15, %cst_11 [1] : vector<16x32xf32> to vector<16xf32>
    %17 = vector.shape_cast %16 : vector<16xf32> to vector<16x1xf32>
    %cst_12 = arith.constant 3.200000e+01 : f32
    %18 = vector.broadcast %cst_12 : f32 to vector<16x1xf32>
    %19 = arith.divf %17, %18 : vector<16x1xf32>
    %20 = vector.broadcast %19 : vector<16x1xf32> to vector<16x32xf32>
    %21 = arith.subf %15, %20 : vector<16x32xf32>
    %22 = arith.mulf %21, %21 : vector<16x32xf32>
    %cst_13 = arith.constant dense<0.000000e+00> : vector<16xf32>
    %23 = vector.multi_reduction <add>, %22, %cst_13 [1] : vector<16x32xf32> to vector<16xf32>
    %24 = vector.shape_cast %23 : vector<16xf32> to vector<16x1xf32>
    %cst_14 = arith.constant 3.200000e+01 : f32
    %25 = vector.broadcast %cst_14 : f32 to vector<16x1xf32>
    %26 = arith.divf %24, %25 : vector<16x1xf32>
    %cst_15 = arith.constant 9.99999974E-6 : f32
    %27 = vector.broadcast %cst_15 : f32 to vector<16x1xf32>
    %28 = arith.addf %26, %27 : vector<16x1xf32>
    %29 = math.rsqrt %28 : vector<16x1xf32>
    %30 = vector.broadcast %29 : vector<16x1xf32> to vector<16x32xf32>
    %31 = arith.mulf %21, %30 : vector<16x32xf32>
    %c0_16 = arith.constant 0 : index
    %c0_17 = arith.constant 0 : index
    %32 = vector.load %arg6[%c0_16, %c0_17] : memref<1x32xf32, #tpu.memory_space<vmem>>, vector<1x32xf32>
    %33 = vector.broadcast %32 : vector<1x32xf32> to vector<16x32xf32>
    %34 = arith.mulf %31, %33 : vector<16x32xf32>
    %c0_18 = arith.constant 0 : index
    %c0_19 = arith.constant 0 : index
    %35 = vector.load %arg7[%c0_18, %c0_19] : memref<1x32xf32, #tpu.memory_space<vmem>>, vector<1x32xf32>
    %36 = vector.broadcast %35 : vector<1x32xf32> to vector<16x32xf32>
    %37 = arith.addf %34, %36 : vector<16x32xf32>
    %c0_20 = arith.constant 0 : index
    %c0_21 = arith.constant 0 : index
    %38 = vector.load %arg8[%c0_20, %c0_21] : memref<16x32xf32, #tpu.memory_space<vmem>>, vector<16x32xf32>
    tpu.vector_store %arg8[%c0_20, %c0_21], %37 {strides = array<i32>} : memref<16x32xf32, #tpu.memory_space<vmem>>, vector<16x32xf32>,
    return
  }
  func.func @transform_0(%arg0: i32) -> (i32, i32) {
    %c0_i32 = arith.constant 0 : i32
    %c0_i32_0 = arith.constant 0 : i32
    return %arg0, %c0_i32 : i32, i32
  }
  func.func @transform_1(%arg0: i32) -> (i32, i32) {
    %c0_i32 = arith.constant 0 : i32
    %c0_i32_0 = arith.constant 0 : i32
    %c0_i32_1 = arith.constant 0 : i32
    return %c0_i32, %c0_i32_0 : i32, i32
  }
  func.func @transform_2(%arg0: i32) -> (i32, i32) {
    %c0_i32 = arith.constant 0 : i32
    %c0_i32_0 = arith.constant 0 : i32
    %c0_i32_1 = arith.constant 0 : i32
    return %c0_i32, %c0_i32_0 : i32, i32
  }
  func.func @transform_3(%arg0: i32) -> (i32, i32) {
    %c0_i32 = arith.constant 0 : i32
    %c0_i32_0 = arith.constant 0 : i32
    %c0_i32_1 = arith.constant 0 : i32
    return %c0_i32, %c0_i32_0 : i32, i32
  }
  func.func @transform_4(%arg0: i32) -> (i32, i32) {
    %c0_i32 = arith.constant 0 : i32
    %c0_i32_0 = arith.constant 0 : i32
    %c0_i32_1 = arith.constant 0 : i32
    return %c0_i32, %c0_i32_0 : i32, i32
  }
  func.func @transform_5(%arg0: i32) -> (i32, i32) {
    %c0_i32 = arith.constant 0 : i32
    %c0_i32_0 = arith.constant 0 : i32
    %c0_i32_1 = arith.constant 0 : i32
    return %c0_i32, %c0_i32_0 : i32, i32
  }
  func.func @transform_6(%arg0: i32) -> (i32, i32) {
    %c0_i32 = arith.constant 0 : i32
    %c0_i32_0 = arith.constant 0 : i32
    %c0_i32_1 = arith.constant 0 : i32
    return %c0_i32, %c0_i32_0 : i32, i32
  }
  func.func @transform_7(%arg0: i32) -> (i32, i32) {
    %c0_i32 = arith.constant 0 : i32
    %c0_i32_0 = arith.constant 0 : i32
    return %arg0, %c0_i32 : i32, i32
  }
}

</mosaic_0001>

<llo_original>
// kernel: tpu_custom_call.1
$region0: #{tpu_custom_call.1}
  #allocation0 [shape = 'u32[]', space=smem, size = 0x4, offset = 0x4, fixed_abs, tag = 'smem constant byte address 0x4 - core index']
  #allocation1 [shape = 'u32[72,128]{1,0:T(1,128)}', space=vmem, size = 0x9000, scoped, tag = 'internal scratch']
  %s0 = inlined_call_operand.vmem [shape: f32[16,32], index: 0, kind: input, shape index: {}]
  %s1 = inlined_call_operand.vmem [shape: f32[32,160], index: 1, kind: input, shape index: {}]
  %s2 = inlined_call_operand.vmem [shape: f32[1,160], index: 2, kind: input, shape index: {}]
  %s3 = inlined_call_operand.vmem [shape: f32[128,32], index: 3, kind: input, shape index: {}]
  %s4 = inlined_call_operand.vmem [shape: f32[1,32], index: 4, kind: input, shape index: {}]
  %s5 = inlined_call_operand.vmem [shape: f32[1,32], index: 5, kind: input, shape index: {}]
  %s6 = inlined_call_operand.vmem [shape: f32[1,32], index: 6, kind: input, shape index: {}]
  %s7 = inlined_call_operand.hbm [shape: f32[16,32], index: 7, kind: output, shape index: {}]
  %s8 = sld [smem:[#allocation0]]
  $region38: #{tpu_custom_call.1} parent=0
    _
  %s10 = ssub.s32 1, %s8
  %s11 = scalar_select 0, %s10, %s8
  $region1: #{tpu_custom_call.1} parent=0
    #allocation2 [shape = 'u8[8192]{0}', space=vmem, size = 0x2000, scoped, tag = 'output window, operand 0, single buffered']
    #allocation3 [shape = 's32[1]{0}', space=sflag, size = 0x4, scoped, tag = 'scoped memory for tpu_custom_call.1']
    %12 = vsyncpa [#allocation3], 0
    // Predicated region
    $region2: #{tpu_custom_call.1} parent=1 // pred_check
      _
    $region3: #{tpu_custom_call.1} parent=1 // pred_check_branch
      %14 = sbr.rel (0) target = $region5
    $region4: #{tpu_custom_call.1} parent=1 // pred_region
      _
    $region5: #{tpu_custom_call.1} parent=1 // pred_fallthru
      _
    // Predicated region
    $region6: #{tpu_custom_call.1} parent=1 // pred_check
      _
    $region7: #{tpu_custom_call.1} parent=1 // pred_check_branch
      %16 = sbr.rel (0) target = $region9
    $region8: #{tpu_custom_call.1} parent=1 // pred_region
      _
    $region9: #{tpu_custom_call.1} parent=1 // pred_fallthru
      _
    // Predicated region
    $region10: #{tpu_custom_call.1} parent=1 // pred_check
      _
    $region11: #{tpu_custom_call.1} parent=1 // pred_check_branch
      %18 = sbr.rel (0) target = $region13
    $region12: #{tpu_custom_call.1} parent=1 // pred_region
      _
    $region13: #{tpu_custom_call.1} parent=1 // pred_fallthru
      _
    // Predicated region
    $region14: #{tpu_custom_call.1} parent=1 // pred_check
      _
    $region15: #{tpu_custom_call.1} parent=1 // pred_check_branch
      %20 = sbr.rel (0) target = $region17
    $region16: #{tpu_custom_call.1} parent=1 // pred_region
      _
    $region17: #{tpu_custom_call.1} parent=1 // pred_fallthru
      _
    // Predicated region
    $region18: #{tpu_custom_call.1} parent=1 // pred_check
      _
    $region19: #{tpu_custom_call.1} parent=1 // pred_check_branch
      %22 = sbr.rel (0) target = $region21
    $region20: #{tpu_custom_call.1} parent=1 // pred_region
      _
    $region21: #{tpu_custom_call.1} parent=1 // pred_fallthru
      _
    // Predicated region
    $region22: #{tpu_custom_call.1} parent=1 // pred_check
      _
    $region23: #{tpu_custom_call.1} parent=1 // pred_check_branch
      %24 = sbr.rel (0) target = $region25
    $region24: #{tpu_custom_call.1} parent=1 // pred_region
      _
    $region25: #{tpu_custom_call.1} parent=1 // pred_fallthru
      _
    // Predicated region
    $region26: #{tpu_custom_call.1} parent=1 // pred_check
      _
    $region27: #{tpu_custom_call.1} parent=1 // pred_check_branch
      %26 = sbr.rel (0) target = $region29
    $region28: #{tpu_custom_call.1} parent=1 // pred_region
      _
    $region29: #{tpu_custom_call.1} parent=1 // pred_fallthru
      _
    %v27 = vld [vmem:[%s0] sm:$0xff]
    %v28 = vld [vmem:[%s0 + $0x8] sm:$0xff]
    %v29 = vld [vmem:[%s1] sm:$0xff]
    %v30 = vld [vmem:[%s1 + $0x8] sm:$0xff]
    %v31 = vld [vmem:[%s1 + $0x10] sm:$0xff]
    %v32 = vld [vmem:[%s1 + $0x18] sm:$0xff]
    %v33 = vld [vmem:[%s1 + $0x20] sm:$0xff]
    %v34 = vld [vmem:[%s1 + $0x28] sm:$0xff]
    %v35 = vld [vmem:[%s1 + $0x30] sm:$0xff]
    %v36 = vld [vmem:[%s1 + $0x38] sm:$0xff]
    %v37 = vld [vmem:[%s2] sm:$0x3]
    %v39 = vperm.slane %v37, 0
    %v40 = vperm.slane %v37, 1
    %vm43 = vcmask 261120
    %v45 = vsel %vm43, %v27, 0
    %v48 = vsel %vm43, %v28, 0
    %50 = vmatpush.msra.mxu0 0.0
    %51 = vmatpush.msra.mxu0 0.0
    %52 = vmatpush.msra.mxu0 0.0
    %53 = vmatpush.msra.mxu0 0.0
    %54 = vmatpush.msra.mxu0 0.0
    %55 = vmatpush.msra.mxu0 0.0
    %56 = vmatpush.msra.mxu0 0.0
    %57 = vmatpush.msra.mxu0 0.0
    %58 = vmatpush.msra.mxu0 0.0
    %59 = vmatpush.msra.mxu0 0.0
    %60 = vmatpush.msra.mxu0 0.0
    %61 = vmatpush.msra.mxu0 0.0
    %62 = vmatpush.msra.mxu0 %v35
    %63 = vmatpush.msra.mxu0 %v33
    %64 = vmatpush.msra.mxu0 %v31
    %65 = vmatpush.msra.mxu0 %v29
    %66 = vmatmul.f32.gmra.mxu0 %v45
    %v67 = vpop.f32.mrf.mxu0
    %v68 = vadd.f32 %v39, %v67
    %69 = vmatmul.f32.gmra.mxu0 %v48
    %v70 = vpop.f32.mrf.mxu0
    %v71 = vadd.f32 %v39, %v70
    %72 = vdwg.mxu0
    %73 = vmatpush.msra.mxu0 0.0
    %74 = vmatpush.msra.mxu0 0.0
    %75 = vmatpush.msra.mxu0 0.0
    %76 = vmatpush.msra.mxu0 0.0
    %77 = vmatpush.msra.mxu0 0.0
    %78 = vmatpush.msra.mxu0 0.0
    %79 = vmatpush.msra.mxu0 0.0
    %80 = vmatpush.msra.mxu0 0.0
    %81 = vmatpush.msra.mxu0 0.0
    %82 = vmatpush.msra.mxu0 0.0
    %83 = vmatpush.msra.mxu0 0.0
    %84 = vmatpush.msra.mxu0 0.0
    %85 = vmatpush.msra.mxu0 %v36
    %86 = vmatpush.msra.mxu0 %v34
    %87 = vmatpush.msra.mxu0 %v32
    %88 = vmatpush.msra.mxu0 %v30
    %89 = vmatmul.f32.gmra.mxu0 %v45
    %v90 = vpop.f32.mrf.mxu0
    %v91 = vadd.f32 %v40, %v90
    %92 = vmatmul.f32.gmra.mxu0 %v48
    %v93 = vpop.f32.mrf.mxu0
    %v94 = vadd.f32 %v40, %v93
    %95 = vdwg.mxu0
    %v96 = vmax.f32 %v68, 0.0
    %v97 = vmax.f32 %v71, 0.0
    %v98 = vld [vmem:[%s3] sm:$0xff]
    %v99 = vld [vmem:[%s3 + $0x8] sm:$0xff]
    %v100 = vld [vmem:[%s3 + $0x10] sm:$0xff]
    %v101 = vld [vmem:[%s3 + $0x18] sm:$0xff]
    %v102 = vld [vmem:[%s3 + $0x20] sm:$0xff]
    %v103 = vld [vmem:[%s3 + $0x28] sm:$0xff]
    %v104 = vld [vmem:[%s3 + $0x30] sm:$0xff]
    %v105 = vld [vmem:[%s3 + $0x38] sm:$0xff]
    %v106 = vld [vmem:[%s3 + $0x40] sm:$0xff]
    %v107 = vld [vmem:[%s3 + $0x48] sm:$0xff]
    %v108 = vld [vmem:[%s3 + $0x50] sm:$0xff]
    %v109 = vld [vmem:[%s3 + $0x58] sm:$0xff]
    %v110 = vld [vmem:[%s3 + $0x60] sm:$0xff]
    %v111 = vld [vmem:[%s3 + $0x68] sm:$0xff]
    %v112 = vld [vmem:[%s3 + $0x70] sm:$0xff]
    %v113 = vld [vmem:[%s3 + $0x78] sm:$0xff]
    %v114 = vld [vmem:[%s4] sm:$0x1]
    %v116 = vperm.slane %v114, 0
    %118 = vmatpush.msra.mxu0 %v113
    %119 = vmatpush.msra.mxu0 %v112
    %120 = vmatpush.msra.mxu0 %v111
    %121 = vmatpush.msra.mxu0 %v110
    %122 = vmatpush.msra.mxu0 %v109
    %123 = vmatpush.msra.mxu0 %v108
    %124 = vmatpush.msra.mxu0 %v107
    %125 = vmatpush.msra.mxu0 %v106
    %126 = vmatpush.msra.mxu0 %v105
    %127 = vmatpush.msra.mxu0 %v104
    %128 = vmatpush.msra.mxu0 %v103
    %129 = vmatpush.msra.mxu0 %v102
    %130 = vmatpush.msra.mxu0 %v101
    %131 = vmatpush.msra.mxu0 %v100
    %132 = vmatpush.msra.mxu0 %v99
    %133 = vmatpush.msra.mxu0 %v98
    %134 = vmatmul.f32.gmra.mxu0 %v96
    %v135 = vpop.f32.mrf.mxu0
    %v136 = vadd.f32 %v116, %v135
    %137 = vmatmul.f32.gmra.mxu0 %v97
    %v138 = vpop.f32.mrf.mxu0
    %v139 = vadd.f32 %v116, %v138
    %140 = vdwg.mxu0
    %v141 = vadd.f32 %v136, %v91
    %v142 = vadd.f32 %v139, %v94
    %v143 = vsel %vm43, %v141, 0.0
    %144 = vadd.xlane.f32.xlu0 %v143
    %v145 = vpop.xlane.xlu0 %144
    %v146 = vsel %vm43, %v142, 0.0
    %147 = vadd.xlane.f32.xlu0 %v146
    %v148 = vpop.xlane.xlu0 %147
    %v149 = vrcp.pop 32.0
    %v150 = vmul.f32 32.0, %v149
    %v151 = vsub.f32 1.0, %v150
    %v152 = vmul.f32 %v149, %v151
    %v153 = vadd.f32 %v149, %v152
    %vm154 = vweird.f32 %v149
    %v155 = vsel %vm154, %v149, %v153
    %v156 = vmul.f32 %v145, %v155
    %v157 = vmul.f32 %v148, %v155
    %v158 = vsub.f32 %v141, %v156
    %v159 = vsub.f32 %v142, %v157
    %v160 = vmul.f32 %v158, %v158
    %v161 = vmul.f32 %v159, %v159
    %v162 = vsel %vm43, %v160, 0.0
    %163 = vadd.xlane.f32.xlu0 %v162
    %v164 = vpop.xlane.xlu0 %163
    %v165 = vsel %vm43, %v161, 0.0
    %166 = vadd.xlane.f32.xlu0 %v165
    %v167 = vpop.xlane.xlu0 %166
    %v168 = vmul.f32 %v164, %v155
    %v169 = vmul.f32 %v167, %v155
    %v170 = vadd.f32 %v168, 1e-05
    %v171 = vadd.f32 %v169, 1e-05
    %v172 = vrsqrt.pop %v170
    %v173 = vmul.f32 %v172, %v170
    %v174 = vmul.f32 %v173, %v172
    %v175 = vmul.f32 0.5, %v174
    %v176 = vsub.f32 1.5, %v175
    %v177 = vmul.f32 %v172, %v176
    %vm178 = vweird.f32 %v170
    %vm179 = vweird.f32 %v172
    %vm180 = vmor %vm178, %vm179
    %v181 = vsel %vm180, %v172, %v177
    %v182 = vrsqrt.pop %v171
    %v183 = vmul.f32 %v182, %v171
    %v184 = vmul.f32 %v183, %v182
    %v185 = vmul.f32 0.5, %v184
    %v186 = vsub.f32 1.5, %v185
    %v187 = vmul.f32 %v182, %v186
    %vm188 = vweird.f32 %v171
    %vm189 = vweird.f32 %v182
    %vm190 = vmor %vm188, %vm189
    %v191 = vsel %vm190, %v182, %v187
    %v192 = vmul.f32 %v158, %v181
    %v193 = vmul.f32 %v159, %v191
    %v194 = vld [vmem:[%s5] sm:$0x1]
    %v196 = vperm.slane %v194, 0
    %v198 = vmul.f32 %v192, %v196
    %v199 = vmul.f32 %v193, %v196
    %v200 = vld [vmem:[%s6] sm:$0x1]
    %v202 = vperm.slane %v200, 0
    %v204 = vadd.f32 %v198, %v202
    %v205 = vadd.f32 %v199, %v202
    %206 = vst.msk [vmem:[#allocation2] sm:$0xff] %vm43, %v204
    %207 = vst.msk [vmem:[#allocation2 + $0x8] sm:$0xff] %vm43, %v205
    // Predicated region
    $region30: #{tpu_custom_call.1} parent=1 // pred_check
      _
    $region31: #{tpu_custom_call.1} parent=1 // pred_check_branch
      %209 = sbr.rel (0) target = $region33
    $region32: #{tpu_custom_call.1} parent=1 // pred_region
      %211 = vsyncadd [#allocation3], 0
      %s212 = sshll.u32 [#allocation2], 4
      %s213 = int_to_ptr.vmem [resolvable:$true] %s212
      %s214 = sshll.u32 %s7, 4
      %s215 = int_to_ptr.hbm [resolvable:$true] %s214
      %220 = dma.vmem_to_hbm [thread:$0]  %s213, 256, %s215, [#allocation3], 128, 128, 8
    $region33: #{tpu_custom_call.1} parent=1 // pred_fallthru
      _
    // Predicated region
    $region34: #{tpu_custom_call.1} parent=1 // pred_check
      _
    $region35: #{tpu_custom_call.1} parent=1 // pred_check_branch
      %222 = sbr.rel (0) target = $region37
    $region36: #{tpu_custom_call.1} parent=1 // pred_region
      %224 = dma.done [#allocation3], 256
    $region37: #{tpu_custom_call.1} parent=1 // pred_fallthru
      _
    %225 = vsyncpa [#allocation3], 1

</llo_original>
